<compile_context>
chip_gen: v7x
topology: tpu7x:2x2x1
jax: 0.10.0
libtpu: 0.0.40
codegen_flags: <defaults>
</compile_context>

<pallas_src>
import jax
import jax.numpy as jnp
from jax.experimental import pallas as pl
from jax.experimental.pallas import tpu as pltpu


NEG_SLOPE = 0.01  # F.leaky_relu default


def _leaky_relu(x):
    return jnp.where(x > 0, x, NEG_SLOPE * x)


def _round_up(x, m):
    return ((x + m - 1) // m) * m


def cvae_forward_kernel(
    feat_ref,    # (TB, F)        f32  feature tile
    tgt_ref,     # (TB, 1)        i32  class-label tile
    eps_ref,     # (TB, Lp)       f32  N(0,1) noise tile (zero-padded past L)
    w1f_ref,     # (F, Hp)        bf16 hidden_1 weight, feature rows
    wcls_ref,    # (Cp, 2*Hp)     bf16 fused class table [hidden_1 | linear_3]
    b1_ref,      # (1, Hp)        f32
    wmv_ref,     # (Hp, 2*Lp)     bf16 fused, lane-padded [z_mean | z_log_var]
    bmv_ref,     # (1, 2*Lp)      f32
    w3e_ref,     # (Lp, Hp)       bf16 linear_3 weight, latent rows
    b3_ref,      # (1, Hp)        f32
    w4_ref,      # (Hp, Op)       bf16
    b4_ref,      # (1, Op)        f32
    zpack_ref,   # out (TB, 3*Lp) f32  [z_mean | z_log_var | encoded]
    dec_ref,     # out (TB, Op)        decoded (sigmoid)
):
    TB = feat_ref.shape[0]
    Hp = b1_ref.shape[1]
    Lp = eps_ref.shape[1]
    Cp = wcls_ref.shape[0]

    feats = feat_ref[...]
    tgt = tgt_ref[...]                # (TB, 1) int32
    eps = eps_ref[...]                # (TB, Lp)

    # one-hot(targets) via iota compare, then ONE bf16 MXU matmul against the
    # fused class table: replaces the O(C*TB*H) VPU select-accumulate loop and
    # the wrapper-side concat([features, onehot]).
    onehot = (jax.lax.broadcasted_iota(jnp.int32, (TB, Cp), 1) == tgt)
    onehot = onehot.astype(jnp.bfloat16)
    cls = jnp.dot(onehot, wcls_ref[...], preferred_element_type=jnp.float32)
    cls1 = cls[:, :Hp]                # hidden_1 class contribution
    cls3 = cls[:, Hp:]                # linear_3 class contribution

    # encoder hidden: leaky_relu(concat(x, onehot) @ W1 + b1)
    h = (jnp.dot(feats.astype(jnp.bfloat16), w1f_ref[...],
                 preferred_element_type=jnp.float32)
         + cls1 + b1_ref[...])
    h = _leaky_relu(h)

    # fused z_mean | z_log_var heads: one (Hp, 2*Lp) matmul; 128-aligned splits
    z_mv = (jnp.dot(h.astype(jnp.bfloat16), wmv_ref[...],
                    preferred_element_type=jnp.float32)
            + bmv_ref[...])
    z_mean = z_mv[:, :Lp]
    z_log_var = z_mv[:, Lp:]

    # reparameterize: z = mu + eps * exp(log_var / 2)
    encoded = z_mean + eps * jnp.exp(z_log_var * 0.5)

    # decoder: linear_3(concat(encoded, onehot)) as split matmul + class matmul
    d = (jnp.dot(encoded.astype(jnp.bfloat16), w3e_ref[...],
                 preferred_element_type=jnp.float32)
         + cls3 + b3_ref[...])
    d = _leaky_relu(d)

    out = (jnp.dot(d.astype(jnp.bfloat16), w4_ref[...],
                   preferred_element_type=jnp.float32)
           + b4_ref[...])

    # single lane-dense, unmasked full-block stores
    zpack_ref[...] = jnp.concatenate([z_mv, encoded], axis=-1)
    dec_ref[...] = jax.nn.sigmoid(out).astype(dec_ref.dtype)


def cvae_forward(features, targets, params, eps, num_classes,
                 batch_tile=512, decoded_dtype=jnp.float32):
    """features: (B, F) f32, targets: (B,) int32, eps: (B, L) f32."""
    B, F = features.shape
    L = params["wm"].shape[1]
    C = num_classes
    H = params["w1"].shape[1]

    Hp = _round_up(H, 128)       # hidden lanes
    Lp = _round_up(L, 128)       # each latent head padded to 128-lane slot
    Cp = _round_up(C, 128)       # one-hot K dim: one full lane vreg
    Op = _round_up(F + C, 128)   # decoder output lanes

    def pad2(a, rows, cols):
        return jnp.pad(a, ((0, rows - a.shape[0]), (0, cols - a.shape[1])))

    # ---- weight prep: split concat rows, fuse heads, pad N dims, bf16 MXU ----
    w1 = params["w1"]                                        # (F + C, H)
    w1f = pad2(w1[:F, :], F, Hp).astype(jnp.bfloat16)
    w1c = pad2(w1[F:, :], Cp, Hp)
    w3 = params["w3"]                                        # (L + C, H)
    w3e = pad2(w3[:L, :], Lp, Hp).astype(jnp.bfloat16)
    w3c = pad2(w3[L:, :], Cp, Hp)
    wcls = jnp.concatenate([w1c, w3c], axis=1).astype(jnp.bfloat16)   # (Cp, 2Hp)
    wmv = jnp.concatenate([pad2(params["wm"], Hp, Lp),
                           pad2(params["wv"], Hp, Lp)], axis=1).astype(jnp.bfloat16)
    bmv = jnp.concatenate([pad2(params["bm"], 1, Lp),
                           pad2(params["bv"], 1, Lp)], axis=1).astype(jnp.float32)
    b1 = pad2(params["b1"], 1, Hp).astype(jnp.float32)
    b3 = pad2(params["b3"], 1, Hp).astype(jnp.float32)
    w4 = pad2(params["w4"], Hp, Op).astype(jnp.bfloat16)
    b4 = pad2(params["b4"], 1, Op).astype(jnp.float32)

    # ---- batch tiling (sublane granule = 8); pad B if needed ----
    TB = max(8, _round_up(min(batch_tile, B), 8))
    if B > 8:
        # prefer >= 2 grid steps so v7x can shard batch tiles across both TCs
        TB = min(TB, max(8, _round_up((B + 1) // 2, 8)))
    Bp = pl.cdiv(B, TB) * TB

    feats_p = jnp.pad(features.astype(jnp.float32), ((0, Bp - B), (0, 0)))
    eps_p = jnp.pad(eps.astype(jnp.float32), ((0, Bp - B), (0, Lp - L)))
    tgt2d = jnp.pad(targets.astype(jnp.int32), ((0, Bp - B),)).reshape(Bp, 1)

    grid = (Bp // TB,)

    def btile(width):
        return pl.BlockSpec((TB, width), lambda i: (i, 0))

    def resident(shape):
        # constant index_map: block is DMA'd once and stays VMEM-resident across
        # grid steps (Mosaic skips re-copies of constant-index blocks).
        return pl.BlockSpec(shape, lambda i: (0, 0))

    in_specs = [
        btile(F),                       # features
        btile(1),                       # targets
        btile(Lp),                      # eps
        resident((F, Hp)), resident((Cp, 2 * Hp)), resident((1, Hp)),
        resident((Hp, 2 * Lp)), resident((1, 2 * Lp)),
        resident((Lp, Hp)), resident((1, Hp)),
        resident((Hp, Op)), resident((1, Op)),
    ]
    out_specs = (btile(3 * Lp), btile(Op))
    out_shape = (
        jax.ShapeDtypeStruct((Bp, 3 * Lp), jnp.float32),   # [mu | logvar | z]
        jax.ShapeDtypeStruct((Bp, Op), decoded_dtype),     # decoded
    )

    # VMEM budget: double-buffered activation tiles + bf16 weights + f32 biases,
    # with 2x headroom; capped at 48 MiB (safe on v5e/v6e 128 MiB, v7x 64 MiB).
    act_bytes = 2 * TB * (F + 1 + Lp + 3 * Lp + Op) * 4
    wt_bytes = 2 * 2 * (F * Hp + Cp * 2 * Hp + Hp * 2 * Lp + Lp * Hp + Hp * Op)
    b_bytes = 2 * 4 * (2 * Hp + 2 * Lp + Op)
    vmem_limit = int(min(48 * 2 ** 20,
                         max(16 * 2 ** 20, 2 * (act_bytes + wt_bytes + b_bytes))))

    zpack, decoded = pl.pallas_call(
        cvae_forward_kernel,
        grid=grid,
        in_specs=in_specs,
        out_specs=out_specs,
        out_shape=out_shape,
        compiler_params=pltpu.CompilerParams(
            dimension_semantics=("parallel",),   # shard batch tiles across TCs
            vmem_limit_bytes=vmem_limit,
        ),
    )(feats_p, tgt2d, eps_p,
      w1f, wcls, b1, wmv, bmv, w3e, b3, w4, b4)

    z_mean = zpack[:B, :L]
    z_log_var = zpack[:B, Lp:Lp + L]
    encoded = zpack[:B, 2 * Lp:2 * Lp + L]
    decoded = decoded[:B, :F + C]
    return z_mean, z_log_var, encoded, decoded


def init_params(key, num_features, num_hidden_1, num_latent, num_classes):
    """Deterministic synthetic parameters (Linear weights stored as (in, out))."""
    F, H, L, C = num_features, num_hidden_1, num_latent, num_classes
    ks = jax.random.split(key, 10)

    def lin(kw, kb, fan_in, fan_out):
        bound = 1.0 / jnp.sqrt(fan_in)
        w = jax.random.uniform(kw, (fan_in, fan_out), jnp.float32, -bound, bound)
        b = jax.random.uniform(kb, (1, fan_out), jnp.float32, -bound, bound)
        return w, b

    w1, b1 = lin(ks[0], ks[1], F + C, H)
    wm, bm = lin(ks[2], ks[3], H, L)
    wv, bv = lin(ks[4], ks[5], H, L)
    w3, b3 = lin(ks[6], ks[7], L + C, H)
    w4, b4 = lin(ks[8], ks[9], H, F + C)
    return dict(w1=w1, b1=b1, wm=wm, bm=bm, wv=wv, bv=bv,
                w3=w3, b3=b3, w4=w4, b4=b4)


def reference_forward(features, targets, params, eps, num_classes):
    """Pure-JAX f32 mirror of the PyTorch module's forward."""
    onehot = jax.nn.one_hot(targets, num_classes, dtype=jnp.float32)
    x = jnp.concatenate([features, onehot], axis=1)
    h = _leaky_relu(x @ params["w1"] + params["b1"])
    z_mean = h @ params["wm"] + params["bm"]
    z_log_var = h @ params["wv"] + params["bv"]
    encoded = z_mean + eps * jnp.exp(z_log_var / 2.0)
    d = _leaky_relu(jnp.concatenate([encoded, onehot], axis=1) @ params["w3"]
                    + params["b3"])
    decoded = jax.nn.sigmoid(d @ params["w4"] + params["b4"])
    return z_mean, z_log_var, encoded, decoded


if __name__ == "__main__":
    # Small shapes consistent with the module's fully-connected forward.
    B, F, H, L, C = 8, 16, 32, 8, 4

    key = jax.random.PRNGKey(0)
    k_feat, k_tgt, k_eps, k_par = jax.random.split(key, 4)

    features = jax.random.uniform(k_feat, (B, F), jnp.float32)          # pixels in [0,1)
    targets = jax.random.randint(k_tgt, (B,), 0, C, dtype=jnp.int32)    # class labels
    eps = jax.random.normal(k_eps, (B, L), jnp.float32)                 # torch.randn equivalent
    params = init_params(k_par, F, H, L, C)

    outs = jax.block_until_ready(
        cvae_forward(features, targets, params, eps, num_classes=C)
    )
    z_mean, z_log_var, encoded, decoded = outs

    # correctness vs pure-JAX f32 reference (tolerance covers bf16 matmul weights)
    refs = reference_forward(features, targets, params, eps, C)
    names = ("z_mean", "z_log_var", "encoded", "decoded")
    for name, got, want in zip(names, outs, refs):
        assert got.shape == want.shape, (name, got.shape, want.shape)
        err = float(jnp.max(jnp.abs(got - want)))
        assert err < 2e-2, (name, err)

    assert z_mean.shape == (B, L) and z_log_var.shape == (B, L)
    assert encoded.shape == (B, L) and decoded.shape == (B, F + C)
    assert bool(jnp.all((decoded >= 0.0) & (decoded <= 1.0)))

    print("KERNEL_OK")
</pallas_src>

<mosaic_0001>
module attributes {stable_mosaic.version = 11 : i64} {
  func.func @cvae_forward_kernel(%arg0: i32, %arg1: memref<8x16xf32, #tpu.memory_space<vmem>>, %arg2: memref<8x1xi32, #tpu.memory_space<vmem>>, %arg3: memref<8x128xf32, #tpu.memory_space<vmem>>, %arg4: memref<16x128xbf16, #tpu.memory_space<vmem>>, %arg5: memref<128x256xbf16, #tpu.memory_space<vmem>>, %arg6: memref<1x128xf32, #tpu.memory_space<vmem>>, %arg7: memref<128x256xbf16, #tpu.memory_space<vmem>>, %arg8: memref<1x256xf32, #tpu.memory_space<vmem>>, %arg9: memref<128x128xbf16, #tpu.memory_space<vmem>>, %arg10: memref<1x128xf32, #tpu.memory_space<vmem>>, %arg11: memref<128x128xbf16, #tpu.memory_space<vmem>>, %arg12: memref<1x128xf32, #tpu.memory_space<vmem>>, %arg13: memref<8x384xf32, #tpu.memory_space<vmem>>, %arg14: memref<8x128xf32, #tpu.memory_space<vmem>>) attributes {dimension_semantics = [#tpu.dimension_semantics<parallel>], iteration_bounds = array<i64: 1>, scalar_prefetch = 0 : i64, scratch_operands = 0 : i64, tpu.core_type = #tpu.core_type<tc>, window_params = [{transform_indices = @transform_0, window_bounds = array<i64: 8, 16>}, {transform_indices = @transform_1, window_bounds = array<i64: 8, 1>}, {transform_indices = @transform_2, window_bounds = array<i64: 8, 128>}, {pipeline_mode = #tpu.pipeline_mode<synchronous>, transform_indices = @transform_3, window_bounds = array<i64: 16, 128>}, {pipeline_mode = #tpu.pipeline_mode<synchronous>, transform_indices = @transform_4, window_bounds = array<i64: 128, 256>}, {pipeline_mode = #tpu.pipeline_mode<synchronous>, transform_indices = @transform_5, window_bounds = array<i64: 1, 128>}, {pipeline_mode = #tpu.pipeline_mode<synchronous>, transform_indices = @transform_6, window_bounds = array<i64: 128, 256>}, {pipeline_mode = #tpu.pipeline_mode<synchronous>, transform_indices = @transform_7, window_bounds = array<i64: 1, 256>}, {pipeline_mode = #tpu.pipeline_mode<synchronous>, transform_indices = @transform_8, window_bounds = array<i64: 128, 128>}, {pipeline_mode = #tpu.pipeline_mode<synchronous>, transform_indices = @transform_9, window_bounds = array<i64: 1, 128>}, {pipeline_mode = #tpu.pipeline_mode<synchronous>, transform_indices = @transform_10, window_bounds = array<i64: 128, 128>}, {pipeline_mode = #tpu.pipeline_mode<synchronous>, transform_indices = @transform_11, window_bounds = array<i64: 1, 128>}, {transform_indices = @transform_12, window_bounds = array<i64: 8, 384>}, {transform_indices = @transform_13, window_bounds = array<i64: 8, 128>}]} {
    %c0 = arith.constant 0 : index
    %c0_0 = arith.constant 0 : index
    %0 = vector.load %arg1[%c0, %c0_0] : memref<8x16xf32, #tpu.memory_space<vmem>>, vector<8x16xf32>
    %c0_1 = arith.constant 0 : index
    %c0_2 = arith.constant 0 : index
    %1 = vector.load %arg2[%c0_1, %c0_2] : memref<8x1xi32, #tpu.memory_space<vmem>>, vector<8x1xi32>
    %c0_3 = arith.constant 0 : index
    %c0_4 = arith.constant 0 : index
    %2 = vector.load %arg3[%c0_3, %c0_4] : memref<8x128xf32, #tpu.memory_space<vmem>>, vector<8x128xf32>
    %3 = tpu.iota {dimensions = array<i32: 1>} : vector<8x128xi32>
    %4 = vector.broadcast %1 : vector<8x1xi32> to vector<8x128xi32>
    %5 = arith.cmpi eq, %3, %4 : vector<8x128xi32>
    %6 = arith.extui %5 : vector<8x128xi1> to vector<8x128xi32>
    %7 = arith.sitofp %6 : vector<8x128xi32> to vector<8x128xf32>
    %8 = arith.truncf %7 : vector<8x128xf32> to vector<8x128xbf16>
    %c0_5 = arith.constant 0 : index
    %c0_6 = arith.constant 0 : index
    %9 = vector.load %arg5[%c0_5, %c0_6] : memref<128x256xbf16, #tpu.memory_space<vmem>>, vector<128x256xbf16>
    %cst = arith.constant dense<0.000000e+00> : vector<8x256xf32>
    %10 = tpu.matmul %8, %9, %cst {dimension_numbers = #tpu.dot_dimension_numbers<[1], [0], [0], [1], [0, 0, 1, 1], [], []>} : vector<8x128xbf16>, vector<128x256xbf16>, vector<8x256xf32> -> vector<8x256xf32>
    %11 = vector.extract_strided_slice %10 {offsets = [0, 0], sizes = [8, 128], strides = [1, 1]} : vector<8x256xf32> to vector<8x128xf32>
    %12 = vector.extract_strided_slice %10 {offsets = [0, 128], sizes = [8, 128], strides = [1, 1]} : vector<8x256xf32> to vector<8x128xf32>
    %13 = arith.truncf %0 : vector<8x16xf32> to vector<8x16xbf16>
    %c0_7 = arith.constant 0 : index
    %c0_8 = arith.constant 0 : index
    %14 = vector.load %arg4[%c0_7, %c0_8] : memref<16x128xbf16, #tpu.memory_space<vmem>>, vector<16x128xbf16>
    %cst_9 = arith.constant dense<0.000000e+00> : vector<8x128xf32>
    %15 = tpu.matmul %13, %14, %cst_9 {dimension_numbers = #tpu.dot_dimension_numbers<[1], [0], [0], [1], [0, 0, 1, 1], [], []>} : vector<8x16xbf16>, vector<16x128xbf16>, vector<8x128xf32> -> vector<8x128xf32>
    %16 = arith.addf %15, %11 : vector<8x128xf32>
    %c0_10 = arith.constant 0 : index
    %c0_11 = arith.constant 0 : index
    %17 = vector.load %arg6[%c0_10, %c0_11] : memref<1x128xf32, #tpu.memory_space<vmem>>, vector<1x128xf32>
    %18 = vector.broadcast %17 : vector<1x128xf32> to vector<8x128xf32>
    %19 = arith.addf %16, %18 : vector<8x128xf32>
    %cst_12 = arith.constant 0.000000e+00 : f32
    %20 = vector.broadcast %cst_12 : f32 to vector<8x128xf32>
    %21 = arith.cmpf ogt, %19, %20 : vector<8x128xf32>
    %cst_13 = arith.constant 0.00999999977 : f32
    %22 = vector.broadcast %cst_13 : f32 to vector<8x128xf32>
    %23 = arith.mulf %22, %19 : vector<8x128xf32>
    %24 = arith.select %21, %19, %23 : vector<8x128xi1>, vector<8x128xf32>
    %25 = arith.truncf %24 : vector<8x128xf32> to vector<8x128xbf16>
    %c0_14 = arith.constant 0 : index
    %c0_15 = arith.constant 0 : index
    %26 = vector.load %arg7[%c0_14, %c0_15] : memref<128x256xbf16, #tpu.memory_space<vmem>>, vector<128x256xbf16>
    %cst_16 = arith.constant dense<0.000000e+00> : vector<8x256xf32>
    %27 = tpu.matmul %25, %26, %cst_16 {dimension_numbers = #tpu.dot_dimension_numbers<[1], [0], [0], [1], [0, 0, 1, 1], [], []>} : vector<8x128xbf16>, vector<128x256xbf16>, vector<8x256xf32> -> vector<8x256xf32>
    %c0_17 = arith.constant 0 : index
    %c0_18 = arith.constant 0 : index
    %28 = vector.load %arg8[%c0_17, %c0_18] : memref<1x256xf32, #tpu.memory_space<vmem>>, vector<1x256xf32>
    %29 = vector.broadcast %28 : vector<1x256xf32> to vector<8x256xf32>
    %30 = arith.addf %27, %29 : vector<8x256xf32>
    %31 = vector.extract_strided_slice %30 {offsets = [0, 0], sizes = [8, 128], strides = [1, 1]} : vector<8x256xf32> to vector<8x128xf32>
    %32 = vector.extract_strided_slice %30 {offsets = [0, 128], sizes = [8, 128], strides = [1, 1]} : vector<8x256xf32> to vector<8x128xf32>
    %cst_19 = arith.constant 5.000000e-01 : f32
    %33 = vector.broadcast %cst_19 : f32 to vector<8x128xf32>
    %34 = arith.mulf %32, %33 : vector<8x128xf32>
    %35 = math.exp %34 : vector<8x128xf32>
    %36 = arith.mulf %2, %35 : vector<8x128xf32>
    %37 = arith.addf %31, %36 : vector<8x128xf32>
    %38 = arith.truncf %37 : vector<8x128xf32> to vector<8x128xbf16>
    %c0_20 = arith.constant 0 : index
    %c0_21 = arith.constant 0 : index
    %39 = vector.load %arg9[%c0_20, %c0_21] : memref<128x128xbf16, #tpu.memory_space<vmem>>, vector<128x128xbf16>
    %cst_22 = arith.constant dense<0.000000e+00> : vector<8x128xf32>
    %40 = tpu.matmul %38, %39, %cst_22 {dimension_numbers = #tpu.dot_dimension_numbers<[1], [0], [0], [1], [0, 0, 1, 1], [], []>} : vector<8x128xbf16>, vector<128x128xbf16>, vector<8x128xf32> -> vector<8x128xf32>
    %41 = arith.addf %40, %12 : vector<8x128xf32>
    %c0_23 = arith.constant 0 : index
    %c0_24 = arith.constant 0 : index
    %42 = vector.load %arg10[%c0_23, %c0_24] : memref<1x128xf32, #tpu.memory_space<vmem>>, vector<1x128xf32>
    %43 = vector.broadcast %42 : vector<1x128xf32> to vector<8x128xf32>
    %44 = arith.addf %41, %43 : vector<8x128xf32>
    %cst_25 = arith.constant 0.000000e+00 : f32
    %45 = vector.broadcast %cst_25 : f32 to vector<8x128xf32>
    %46 = arith.cmpf ogt, %44, %45 : vector<8x128xf32>
    %cst_26 = arith.constant 0.00999999977 : f32
    %47 = vector.broadcast %cst_26 : f32 to vector<8x128xf32>
    %48 = arith.mulf %47, %44 : vector<8x128xf32>
    %49 = arith.select %46, %44, %48 : vector<8x128xi1>, vector<8x128xf32>
    %50 = arith.truncf %49 : vector<8x128xf32> to vector<8x128xbf16>
    %c0_27 = arith.constant 0 : index
    %c0_28 = arith.constant 0 : index
    %51 = vector.load %arg11[%c0_27, %c0_28] : memref<128x128xbf16, #tpu.memory_space<vmem>>, vector<128x128xbf16>
    %cst_29 = arith.constant dense<0.000000e+00> : vector<8x128xf32>
    %52 = tpu.matmul %50, %51, %cst_29 {dimension_numbers = #tpu.dot_dimension_numbers<[1], [0], [0], [1], [0, 0, 1, 1], [], []>} : vector<8x128xbf16>, vector<128x128xbf16>, vector<8x128xf32> -> vector<8x128xf32>
    %c0_30 = arith.constant 0 : index
    %c0_31 = arith.constant 0 : index
    %53 = vector.load %arg12[%c0_30, %c0_31] : memref<1x128xf32, #tpu.memory_space<vmem>>, vector<1x128xf32>
    %54 = vector.broadcast %53 : vector<1x128xf32> to vector<8x128xf32>
    %55 = arith.addf %52, %54 : vector<8x128xf32>
    %56 = tpu.concatenate %30, %37 in 1 : vector<8x256xf32>, vector<8x128xf32> -> vector<8x384xf32>
    %c0_32 = arith.constant 0 : index
    %c0_33 = arith.constant 0 : index
    %57 = vector.load %arg13[%c0_32, %c0_33] : memref<8x384xf32, #tpu.memory_space<vmem>>, vector<8x384xf32>
    tpu.vector_store %arg13[%c0_32, %c0_33], %56 {strides = array<i32>} : memref<8x384xf32, #tpu.memory_space<vmem>>, vector<8x384xf32>,
    %58 = arith.negf %55 : vector<8x128xf32>
    %59 = math.exp %58 : vector<8x128xf32>
    %cst_34 = arith.constant 1.000000e+00 : f32
    %60 = vector.broadcast %cst_34 : f32 to vector<8x128xf32>
    %61 = arith.addf %60, %59 : vector<8x128xf32>
    %62 = arith.divf %60, %61 : vector<8x128xf32>
    %c0_35 = arith.constant 0 : index
    %c0_36 = arith.constant 0 : index
    %63 = vector.load %arg14[%c0_35, %c0_36] : memref<8x128xf32, #tpu.memory_space<vmem>>, vector<8x128xf32>
    tpu.vector_store %arg14[%c0_35, %c0_36], %62 {strides = array<i32>} : memref<8x128xf32, #tpu.memory_space<vmem>>, vector<8x128xf32>,
    return
  }
  func.func @transform_0(%arg0: i32) -> (i32, i32) {
    %c0_i32 = arith.constant 0 : i32
    %c0_i32_0 = arith.constant 0 : i32
    return %arg0, %c0_i32 : i32, i32
  }
  func.func @transform_1(%arg0: i32) -> (i32, i32) {
    %c0_i32 = arith.constant 0 : i32
    %c0_i32_0 = arith.constant 0 : i32
    return %arg0, %c0_i32 : i32, i32
  }
  func.func @transform_2(%arg0: i32) -> (i32, i32) {
    %c0_i32 = arith.constant 0 : i32
    %c0_i32_0 = arith.constant 0 : i32
    return %arg0, %c0_i32 : i32, i32
  }
  func.func @transform_3(%arg0: i32) -> (i32, i32) {
    %c0_i32 = arith.constant 0 : i32
    %c0_i32_0 = arith.constant 0 : i32
    %c0_i32_1 = arith.constant 0 : i32
    return %c0_i32, %c0_i32_0 : i32, i32
  }
  func.func @transform_4(%arg0: i32) -> (i32, i32) {
    %c0_i32 = arith.constant 0 : i32
    %c0_i32_0 = arith.constant 0 : i32
    %c0_i32_1 = arith.constant 0 : i32
    return %c0_i32, %c0_i32_0 : i32, i32
  }
  func.func @transform_5(%arg0: i32) -> (i32, i32) {
    %c0_i32 = arith.constant 0 : i32
    %c0_i32_0 = arith.constant 0 : i32
    %c0_i32_1 = arith.constant 0 : i32
    return %c0_i32, %c0_i32_0 : i32, i32
  }
  func.func @transform_6(%arg0: i32) -> (i32, i32) {
    %c0_i32 = arith.constant 0 : i32
    %c0_i32_0 = arith.constant 0 : i32
    %c0_i32_1 = arith.constant 0 : i32
    return %c0_i32, %c0_i32_0 : i32, i32
  }
  func.func @transform_7(%arg0: i32) -> (i32, i32) {
    %c0_i32 = arith.constant 0 : i32
    %c0_i32_0 = arith.constant 0 : i32
    %c0_i32_1 = arith.constant 0 : i32
    return %c0_i32, %c0_i32_0 : i32, i32
  }
  func.func @transform_8(%arg0: i32) -> (i32, i32) {
    %c0_i32 = arith.constant 0 : i32
    %c0_i32_0 = arith.constant 0 : i32
    %c0_i32_1 = arith.constant 0 : i32
    return %c0_i32, %c0_i32_0 : i32, i32
  }
  func.func @transform_9(%arg0: i32) -> (i32, i32) {
    %c0_i32 = arith.constant 0 : i32
    %c0_i32_0 = arith.constant 0 : i32
    %c0_i32_1 = arith.constant 0 : i32
    return %c0_i32, %c0_i32_0 : i32, i32
  }
  func.func @transform_10(%arg0: i32) -> (i32, i32) {
    %c0_i32 = arith.constant 0 : i32
    %c0_i32_0 = arith.constant 0 : i32
    %c0_i32_1 = arith.constant 0 : i32
    return %c0_i32, %c0_i32_0 : i32, i32
  }
  func.func @transform_11(%arg0: i32) -> (i32, i32) {
    %c0_i32 = arith.constant 0 : i32
    %c0_i32_0 = arith.constant 0 : i32
    %c0_i32_1 = arith.constant 0 : i32
    return %c0_i32, %c0_i32_0 : i32, i32
  }
  func.func @transform_12(%arg0: i32) -> (i32, i32) {
    %c0_i32 = arith.constant 0 : i32
    %c0_i32_0 = arith.constant 0 : i32
    return %arg0, %c0_i32 : i32, i32
  }
  func.func @transform_13(%arg0: i32) -> (i32, i32) {
    %c0_i32 = arith.constant 0 : i32
    %c0_i32_0 = arith.constant 0 : i32
    return %arg0, %c0_i32 : i32, i32
  }
}

</mosaic_0001>

<llo_original>
// kernel: tpu_custom_call.1
$region0: #{tpu_custom_call.1}
  #allocation0 [shape = 'u32[]', space=smem, size = 0x4, offset = 0x4, fixed_abs, tag = 'smem constant byte address 0x4 - core index']
  #allocation1 [shape = 'u32[144,128]{1,0:T(1,128)}', space=vmem, size = 0x12000, scoped, tag = 'internal scratch']
  %s0 = inlined_call_operand.vmem [shape: f32[8,16], index: 0, kind: input, shape index: {}]
  %s1 = inlined_call_operand.vmem [shape: s32[8,1], index: 1, kind: input, shape index: {}]
  %s2 = inlined_call_operand.vmem [shape: f32[8,128], index: 2, kind: input, shape index: {}]
  %s3 = inlined_call_operand.hbm [shape: bf16[16,128], index: 3, kind: input, shape index: {}]
  %s4 = inlined_call_operand.hbm [shape: bf16[128,256], index: 4, kind: input, shape index: {}]
  %s5 = inlined_call_operand.vmem [shape: f32[1,128], index: 5, kind: input, shape index: {}]
  %s6 = inlined_call_operand.hbm [shape: bf16[128,256], index: 6, kind: input, shape index: {}]
  %s7 = inlined_call_operand.vmem [shape: f32[1,256], index: 7, kind: input, shape index: {}]
  %s8 = inlined_call_operand.hbm [shape: bf16[128,128], index: 8, kind: input, shape index: {}]
  %s9 = inlined_call_operand.vmem [shape: f32[1,128], index: 9, kind: input, shape index: {}]
  %s10 = inlined_call_operand.hbm [shape: bf16[128,128], index: 10, kind: input, shape index: {}]
  %s11 = inlined_call_operand.vmem [shape: f32[1,128], index: 11, kind: input, shape index: {}]
  %s12 = inlined_call_operand.hbm [shape: f32[8,384], index: 12, kind: output, shape index: {0}]
  %s13 = inlined_call_operand.hbm [shape: f32[8,128], index: 13, kind: output, shape index: {1}]
  %14 = xla_tuple %s12, %s13
  %s15 = sld [smem:[#allocation0]]
  $region86: #{tpu_custom_call.1} parent=0
    _
  %s17 = ssub.s32 1, %s15
  %s18 = scalar_select 0, %s17, %s15
  $region1: #{tpu_custom_call.1} parent=0
    #allocation2 [shape = 'u8[4096]{0}', space=vmem, size = 0x1000, scoped, tag = 'input window, operand 3, single buffered']
    #allocation3 [shape = 's32[1]{0}', space=sflag, size = 0x4, scoped, tag = 'scoped memory for tpu_custom_call.1']
    #allocation4 [shape = 's32[1]{0}', space=sflag, size = 0x4, scoped, tag = 'scoped memory for tpu_custom_call.1']
    #allocation5 [shape = 'u8[65536]{0}', space=vmem, size = 0x10000, scoped, tag = 'input window, operand 4, single buffered']
    #allocation6 [shape = 's32[1]{0}', space=sflag, size = 0x4, scoped, tag = 'scoped memory for tpu_custom_call.1']
    #allocation7 [shape = 'u8[65536]{0}', space=vmem, size = 0x10000, scoped, tag = 'input window, operand 6, single buffered']
    #allocation8 [shape = 'u8[32768]{0}', space=vmem, size = 0x8000, scoped, tag = 'input window, operand 8, single buffered']
    #allocation9 [shape = 's32[1]{0}', space=sflag, size = 0x4, scoped, tag = 'scoped memory for tpu_custom_call.1']
    #allocation10 [shape = 'u8[32768]{0}', space=vmem, size = 0x8000, scoped, tag = 'input window, operand 10, single buffered']
    #allocation11 [shape = 'u8[12288]{0}', space=vmem, size = 0x3000, scoped, tag = 'output window, operand 0, single buffered']
    #allocation12 [shape = 'u8[4096]{0}', space=vmem, size = 0x1000, scoped, tag = 'output window, operand 1, single buffered']
    #allocation13 [shape = 's32[1]{0}', space=sflag, size = 0x4, scoped, tag = 'scoped memory for tpu_custom_call.1']
    %19 = vsyncpa [#allocation3], 0
    %20 = vsyncpa [#allocation6], 0
    %21 = vsyncpa [#allocation9], 0
    %22 = vsyncpa [#allocation4], 0
    %23 = vsyncpa [#allocation13], 0
    // Predicated region
    $region2: #{tpu_custom_call.1} parent=1 // pred_check
      _
    $region3: #{tpu_custom_call.1} parent=1 // pred_check_branch
      %25 = sbr.rel (0) target = $region5
    $region4: #{tpu_custom_call.1} parent=1 // pred_region
      _
    $region5: #{tpu_custom_call.1} parent=1 // pred_fallthru
      _
    // Predicated region
    $region6: #{tpu_custom_call.1} parent=1 // pred_check
      _
    $region7: #{tpu_custom_call.1} parent=1 // pred_check_branch
      %27 = sbr.rel (0) target = $region9
    $region8: #{tpu_custom_call.1} parent=1 // pred_region
      _
    $region9: #{tpu_custom_call.1} parent=1 // pred_fallthru
      _
    // Predicated region
    $region10: #{tpu_custom_call.1} parent=1 // pred_check
      _
    $region11: #{tpu_custom_call.1} parent=1 // pred_check_branch
      %29 = sbr.rel (0) target = $region13
    $region12: #{tpu_custom_call.1} parent=1 // pred_region
      _
    $region13: #{tpu_custom_call.1} parent=1 // pred_fallthru
      _
    // Predicated region
    $region14: #{tpu_custom_call.1} parent=1 // pred_check
      _
    $region15: #{tpu_custom_call.1} parent=1 // pred_check_branch
      %31 = sbr.rel (0) target = $region17
    $region16: #{tpu_custom_call.1} parent=1 // pred_region
      %s33 = ssub.s32 128, 128
      %34 = vsyncadd [#allocation3], %s33
      %s35 = sshll.u32 [#allocation2], 4
      %s36 = int_to_ptr.vmem [resolvable:$true] %s35
      %41 = dma.hbm_to_vmem [thread:$0]  %s3, 128, %s36, [#allocation3], 64, 64, 4
    $region17: #{tpu_custom_call.1} parent=1 // pred_fallthru
      _
    // Predicated region
    $region18: #{tpu_custom_call.1} parent=1 // pred_check
      _
    $region19: #{tpu_custom_call.1} parent=1 // pred_check_branch
      %43 = sbr.rel (0) target = $region21
    $region20: #{tpu_custom_call.1} parent=1 // pred_region
      %s45 = ssub.s32 2048, 2048
      %46 = vsyncadd [#allocation6], %s45
      %s47 = sshll.u32 [#allocation5], 4
      %s48 = int_to_ptr.vmem [resolvable:$true] %s47
      %53 = dma.hbm_to_vmem [thread:$0]  %s4, 2048, %s48, [#allocation6], 128, 128, 8
    $region21: #{tpu_custom_call.1} parent=1 // pred_fallthru
      _
    // Predicated region
    $region22: #{tpu_custom_call.1} parent=1 // pred_check
      _
    $region23: #{tpu_custom_call.1} parent=1 // pred_check_branch
      %55 = sbr.rel (0) target = $region25
    $region24: #{tpu_custom_call.1} parent=1 // pred_region
      _
    $region25: #{tpu_custom_call.1} parent=1 // pred_fallthru
      _
    // Predicated region
    $region26: #{tpu_custom_call.1} parent=1 // pred_check
      _
    $region27: #{tpu_custom_call.1} parent=1 // pred_check_branch
      %57 = sbr.rel (0) target = $region29
    $region28: #{tpu_custom_call.1} parent=1 // pred_region
      %s59 = ssub.s32 2048, 2048
      %60 = vsyncadd [#allocation6], %s59
      %s61 = sshll.u32 [#allocation7], 4
      %s62 = int_to_ptr.vmem [resolvable:$true] %s61
      %67 = dma.hbm_to_vmem [thread:$0]  %s6, 2048, %s62, [#allocation6], 128, 128, 8
    $region29: #{tpu_custom_call.1} parent=1 // pred_fallthru
      _
    // Predicated region
    $region30: #{tpu_custom_call.1} parent=1 // pred_check
      _
    $region31: #{tpu_custom_call.1} parent=1 // pred_check_branch
      %69 = sbr.rel (0) target = $region33
    $region32: #{tpu_custom_call.1} parent=1 // pred_region
      _
    $region33: #{tpu_custom_call.1} parent=1 // pred_fallthru
      _
    // Predicated region
    $region34: #{tpu_custom_call.1} parent=1 // pred_check
      _
    $region35: #{tpu_custom_call.1} parent=1 // pred_check_branch
      %71 = sbr.rel (0) target = $region37
    $region36: #{tpu_custom_call.1} parent=1 // pred_region
      %s73 = ssub.s32 1024, 1024
      %74 = vsyncadd [#allocation9], %s73
      %s75 = sshll.u32 [#allocation8], 4
      %s76 = int_to_ptr.vmem [resolvable:$true] %s75
      %81 = dma.hbm_to_vmem [thread:$0]  %s8, 1024, %s76, [#allocation9], 64, 64, 4
    $region37: #{tpu_custom_call.1} parent=1 // pred_fallthru
      _
    // Predicated region
    $region38: #{tpu_custom_call.1} parent=1 // pred_check
      _
    $region39: #{tpu_custom_call.1} parent=1 // pred_check_branch
      %83 = sbr.rel (0) target = $region41
    $region40: #{tpu_custom_call.1} parent=1 // pred_region
      _
    $region41: #{tpu_custom_call.1} parent=1 // pred_fallthru
      _
    // Predicated region
    $region42: #{tpu_custom_call.1} parent=1 // pred_check
      _
    $region43: #{tpu_custom_call.1} parent=1 // pred_check_branch
      %85 = sbr.rel (0) target = $region45
    $region44: #{tpu_custom_call.1} parent=1 // pred_region
      %s87 = ssub.s32 1024, 1024
      %88 = vsyncadd [#allocation9], %s87
      %s89 = sshll.u32 [#allocation10], 4
      %s90 = int_to_ptr.vmem [resolvable:$true] %s89
      %95 = dma.hbm_to_vmem [thread:$0]  %s10, 1024, %s90, [#allocation9], 64, 64, 4
    $region45: #{tpu_custom_call.1} parent=1 // pred_fallthru
      _
    // Predicated region
    $region46: #{tpu_custom_call.1} parent=1 // pred_check
      _
    $region47: #{tpu_custom_call.1} parent=1 // pred_check_branch
      %97 = sbr.rel (0) target = $region49
    $region48: #{tpu_custom_call.1} parent=1 // pred_region
      _
    $region49: #{tpu_custom_call.1} parent=1 // pred_fallthru
      _
    // Predicated region
    $region50: #{tpu_custom_call.1} parent=1 // pred_check
      _
    $region51: #{tpu_custom_call.1} parent=1 // pred_check_branch
      %99 = sbr.rel (0) target = $region53
    $region52: #{tpu_custom_call.1} parent=1 // pred_region
      %100 = dma.done [#allocation3], 128
    $region53: #{tpu_custom_call.1} parent=1 // pred_fallthru
      _
    // Predicated region
    $region54: #{tpu_custom_call.1} parent=1 // pred_check
      _
    $region55: #{tpu_custom_call.1} parent=1 // pred_check_branch
      %102 = sbr.rel (0) target = $region57
    $region56: #{tpu_custom_call.1} parent=1 // pred_region
      %103 = dma.done [#allocation6], 2048
    $region57: #{tpu_custom_call.1} parent=1 // pred_fallthru
      _
    // Predicated region
    $region58: #{tpu_custom_call.1} parent=1 // pred_check
      _
    $region59: #{tpu_custom_call.1} parent=1 // pred_check_branch
      %105 = sbr.rel (0) target = $region61
    $region60: #{tpu_custom_call.1} parent=1 // pred_region
      %106 = dma.done [#allocation6], 2048
    $region61: #{tpu_custom_call.1} parent=1 // pred_fallthru
      _
    // Predicated region
    $region62: #{tpu_custom_call.1} parent=1 // pred_check
      _
    $region63: #{tpu_custom_call.1} parent=1 // pred_check_branch
      %108 = sbr.rel (0) target = $region65
    $region64: #{tpu_custom_call.1} parent=1 // pred_region
      %109 = dma.done [#allocation9], 1024
    $region65: #{tpu_custom_call.1} parent=1 // pred_fallthru
      _
    // Predicated region
    $region66: #{tpu_custom_call.1} parent=1 // pred_check
      _
    $region67: #{tpu_custom_call.1} parent=1 // pred_check_branch
      %111 = sbr.rel (0) target = $region69
    $region68: #{tpu_custom_call.1} parent=1 // pred_region
      %112 = dma.done [#allocation9], 1024
    $region69: #{tpu_custom_call.1} parent=1 // pred_fallthru
      _
    %v114 = vld [vmem:[%s0] sm:$0xff]
    %v115 = vld [vmem:[%s1] sm:$0xff]
    %v116 = vld [vmem:[%s2] sm:$0xff]
    %v117 = vlaneseq
    %v118 = vand.u32 %v117, 127
    %119 = vset.pattern.permute.xlu0 0
    %120 = vperm.xlu0 %119, %v115
    %v121 = vpop.permute.xlu0 %120
    %vm122 = vcmp.eq.s32.totalorder %v118, %v121
    %v123 = vsel %vm122, 1, 0
    %v124 = vcvt.s32.f32 %v123
    %v125 = vpack.c.bf16 %v124, %v124
    %v126 = vld [vmem:[#allocation5] sm:$0xff]
    %v127 = vld [vmem:[#allocation5 + $0x8] sm:$0xff]
    %v128 = vld [vmem:[#allocation5 + $0x10] sm:$0xff]
    %v129 = vld [vmem:[#allocation5 + $0x18] sm:$0xff]
    %v130 = vld [vmem:[#allocation5 + $0x20] sm:$0xff]
    %v131 = vld [vmem:[#allocation5 + $0x28] sm:$0xff]
    %v132 = vld [vmem:[#allocation5 + $0x30] sm:$0xff]
    %v133 = vld [vmem:[#allocation5 + $0x38] sm:$0xff]
    %v134 = vld [vmem:[#allocation5 + $0x40] sm:$0xff]
    %v135 = vld [vmem:[#allocation5 + $0x48] sm:$0xff]
    %v136 = vld [vmem:[#allocation5 + $0x50] sm:$0xff]
    %v137 = vld [vmem:[#allocation5 + $0x58] sm:$0xff]
    %v138 = vld [vmem:[#allocation5 + $0x60] sm:$0xff]
    %v139 = vld [vmem:[#allocation5 + $0x68] sm:$0xff]
    %v140 = vld [vmem:[#allocation5 + $0x70] sm:$0xff]
    %v141 = vld [vmem:[#allocation5 + $0x78] sm:$0xff]
    %v158 = vunpack.c.l.b16 %v126
    %v159 = vunpack.c.h.b16 %v126
    %v160 = vunpack.c.l.b16 %v127
    %v161 = vunpack.c.h.b16 %v127
    %v162 = vunpack.c.l.b16 %v128
    %v163 = vunpack.c.h.b16 %v128
    %v164 = vunpack.c.l.b16 %v129
    %v165 = vunpack.c.h.b16 %v129
    %v166 = vunpack.c.l.b16 %v130
    %v167 = vunpack.c.h.b16 %v130
    %v168 = vunpack.c.l.b16 %v131
    %v169 = vunpack.c.h.b16 %v131
    %v170 = vunpack.c.l.b16 %v132
    %v171 = vunpack.c.h.b16 %v132
    %v172 = vunpack.c.l.b16 %v133
    %v173 = vunpack.c.h.b16 %v133
    %v174 = vunpack.c.l.b16 %v134
    %v175 = vunpack.c.h.b16 %v134
    %v176 = vunpack.c.l.b16 %v135
    %v177 = vunpack.c.h.b16 %v135
    %v178 = vunpack.c.l.b16 %v136
    %v179 = vunpack.c.h.b16 %v136
    %v180 = vunpack.c.l.b16 %v137
    %v181 = vunpack.c.h.b16 %v137
    %v182 = vunpack.c.l.b16 %v138
    %v183 = vunpack.c.h.b16 %v138
    %v184 = vunpack.c.l.b16 %v139
    %v185 = vunpack.c.h.b16 %v139
    %v186 = vunpack.c.l.b16 %v140
    %v187 = vunpack.c.h.b16 %v140
    %v188 = vunpack.c.l.b16 %v141
    %v189 = vunpack.c.h.b16 %v141
    %v190 = vpack.c.b16 %v160, %v158
    %v191 = vpack.c.b16 %v161, %v159
    %v192 = vpack.c.b16 %v164, %v162
    %v193 = vpack.c.b16 %v165, %v163
    %v194 = vpack.c.b16 %v168, %v166
    %v195 = vpack.c.b16 %v169, %v167
    %v196 = vpack.c.b16 %v172, %v170
    %v197 = vpack.c.b16 %v173, %v171
    %v198 = vpack.c.b16 %v176, %v174
    %v199 = vpack.c.b16 %v177, %v175
    %v200 = vpack.c.b16 %v180, %v178
    %v201 = vpack.c.b16 %v181, %v179
    %v202 = vpack.c.b16 %v184, %v182
    %v203 = vpack.c.b16 %v185, %v183
    %v204 = vpack.c.b16 %v188, %v186
    %v205 = vpack.c.b16 %v189, %v187
    %222 = vmatprep.subr.bf16.mxu0 %v191
    %223 = vmatpush1.bf16.msra.mxu0 %v190
    %224 = vmatprep.subr.bf16.mxu0 %v193
    %225 = vmatpush1.bf16.msra.mxu0 %v192
    %226 = vmatprep.subr.bf16.mxu0 %v195
    %227 = vmatpush1.bf16.msra.mxu0 %v194
    %228 = vmatprep.subr.bf16.mxu0 %v197
    %229 = vmatpush1.bf16.msra.mxu0 %v196
    %230 = vmatprep.subr.bf16.mxu0 %v199
    %231 = vmatpush1.bf16.msra.mxu0 %v198
    %232 = vmatprep.subr.bf16.mxu0 %v201
    %233 = vmatpush1.bf16.msra.mxu0 %v200
    %234 = vmatprep.subr.bf16.mxu0 %v203
    %235 = vmatpush1.bf16.msra.mxu0 %v202
    %236 = vmatprep.subr.bf16.mxu0 %v205
    %237 = vmatpush1.bf16.msra.mxu0 %v204
    %238 = vmatprep.subr.bf16.mxu0 0
    %239 = vmatpush1.bf16.msra.mxu0 0
    %240 = vmatprep.subr.bf16.mxu0 0
    %241 = vmatpush1.bf16.msra.mxu0 0
    %242 = vmatprep.subr.bf16.mxu0 0
    %243 = vmatpush1.bf16.msra.mxu0 0
    %244 = vmatprep.subr.bf16.mxu0 0
    %245 = vmatpush1.bf16.msra.mxu0 0
    %246 = vmatprep.subr.bf16.mxu0 0
    %247 = vmatpush1.bf16.msra.mxu0 0
    %248 = vmatprep.subr.bf16.mxu0 0
    %249 = vmatpush1.bf16.msra.mxu0 0
    %250 = vmatprep.subr.bf16.mxu0 0
    %251 = vmatpush1.bf16.msra.mxu0 0
    %252 = vmatprep.subr.bf16.mxu0 0
    %253 = vmatpush1.bf16.msra.mxu0 0
    %254 = vmatprep.mubr.bf16.mxu0 0
    %255 = vmatmul.mubr.bf16.gmra.mrb[0].mxu0 %v125
    %v256 = vpop.f32.mrb[0].mxu0
    %v257 = vadd.f32 0.0, %v256
    %v258 = vpop.f32.mrb[0].mxu0
    %v259 = vadd.f32 0.0, %v258
    %v260 = vpop.f32.mrb[0].mxu0
    %v261 = vpop.f32.mrb[0].mxu0
    %262 = vdwg.mxu0
    %v263 = vpack.c.bf16 %v114, %v114
    %v264 = vld [vmem:[#allocation2] sm:$0xf]
    %v265 = vld [vmem:[#allocation2 + $0x4] sm:$0xf]
    %v268 = vunpack.c.l.b16 %v264
    %v269 = vunpack.c.l.b16 %v265
    %v270 = vpack.c.b16 %v269, %v268
    %vm272 = vcmask 130048
    %v274 = vsel %vm272, %v263, 0
    %276 = vmatprep.subr.bf16.mxu0 0
    %277 = vmatpush1.bf16.msra.mxu0 %v270
    %278 = vmatprep.subr.bf16.mxu0 0
    %279 = vmatpush1.bf16.msra.mxu0 0
    %280 = vmatprep.subr.bf16.mxu0 0
    %281 = vmatpush1.bf16.msra.mxu0 0
    %282 = vmatprep.subr.bf16.mxu0 0
    %283 = vmatpush1.bf16.msra.mxu0 0
    %284 = vmatprep.subr.bf16.mxu0 0
    %285 = vmatpush1.bf16.msra.mxu0 0
    %286 = vmatprep.subr.bf16.mxu0 0
    %287 = vmatpush1.bf16.msra.mxu0 0
    %288 = vmatprep.subr.bf16.mxu0 0
    %289 = vmatpush1.bf16.msra.mxu0 0
    %290 = vmatprep.subr.bf16.mxu0 0
    %291 = vmatpush1.bf16.msra.mxu0 0
    %292 = vmatprep.subr.bf16.mxu0 0
    %293 = vmatpush1.bf16.msra.mxu0 0
    %294 = vmatprep.subr.bf16.mxu0 0
    %295 = vmatpush1.bf16.msra.mxu0 0
    %296 = vmatprep.subr.bf16.mxu0 0
    %297 = vmatpush1.bf16.msra.mxu0 0
    %298 = vmatprep.subr.bf16.mxu0 0
    %299 = vmatpush1.bf16.msra.mxu0 0
    %300 = vmatprep.subr.bf16.mxu0 0
    %301 = vmatpush1.bf16.msra.mxu0 0
    %302 = vmatprep.subr.bf16.mxu0 0
    %303 = vmatpush1.bf16.msra.mxu0 0
    %304 = vmatprep.subr.bf16.mxu0 0
    %305 = vmatpush1.bf16.msra.mxu0 0
    %306 = vmatprep.subr.bf16.mxu0 0
    %307 = vmatpush1.bf16.msra.mxu0 0
    %308 = vmatprep.mubr.bf16.mxu0 0
    %309 = vmatmul.mubr.bf16.gmra.mrb[0].mxu0 %v274
    %v310 = vpop.f32.mrb[0].mxu0
    %v311 = vadd.f32 %v257, %v310
    %v312 = vpop.f32.mrb[0].mxu0
    %v313 = vpop.f32.mrb[0].mxu0
    %v314 = vpop.f32.mrb[0].mxu0
    %315 = vdwg.mxu0
    %v316 = vld [vmem:[%s5] sm:$0x1]
    %v318 = vlaneseq
    %v319 = vshrl.u32 %v318, 7
    %v320 = vsub.s32 0, %v319
    %v321 = vrot.slane %v316, %v320
    %v323 = vadd.f32 %v311, %v321
    %vm324 = vcmp.gt.f32.partialorder %v323, 0.0
    %v325 = vmul.f32 %v323, 0.01
    %v326 = vsel %vm324, %v323, %v325
    %v327 = vpack.c.bf16 %v326, %v326
    %v328 = vld [vmem:[#allocation7] sm:$0xff]
    %v329 = vld [vmem:[#allocation7 + $0x8] sm:$0xff]
    %v330 = vld [vmem:[#allocation7 + $0x10] sm:$0xff]
    %v331 = vld [vmem:[#allocation7 + $0x18] sm:$0xff]
    %v332 = vld [vmem:[#allocation7 + $0x20] sm:$0xff]
    %v333 = vld [vmem:[#allocation7 + $0x28] sm:$0xff]
    %v334 = vld [vmem:[#allocation7 + $0x30] sm:$0xff]
    %v335 = vld [vmem:[#allocation7 + $0x38] sm:$0xff]
    %v336 = vld [vmem:[#allocation7 + $0x40] sm:$0xff]
    %v337 = vld [vmem:[#allocation7 + $0x48] sm:$0xff]
    %v338 = vld [vmem:[#allocation7 + $0x50] sm:$0xff]
    %v339 = vld [vmem:[#allocation7 + $0x58] sm:$0xff]
    %v340 = vld [vmem:[#allocation7 + $0x60] sm:$0xff]
    %v341 = vld [vmem:[#allocation7 + $0x68] sm:$0xff]
    %v342 = vld [vmem:[#allocation7 + $0x70] sm:$0xff]
    %v343 = vld [vmem:[#allocation7 + $0x78] sm:$0xff]
    %v344 = vld [vmem:[%s7] sm:$0x3]
    %v346 = vlaneseq
    %v347 = vshrl.u32 %v346, 7
    %v348 = vsub.s32 0, %v347
    %v349 = vrot.slane %v344, %v348
    %v350 = vlaneseq
    %v351 = vshrl.u32 %v350, 7
    %v352 = vsub.s32 1, %v351
    %v353 = vrot.slane %v344, %v352
    %v372 = vunpack.c.l.b16 %v328
    %v373 = vunpack.c.h.b16 %v328
    %v374 = vunpack.c.l.b16 %v329
    %v375 = vunpack.c.h.b16 %v329
    %v376 = vunpack.c.l.b16 %v330
    %v377 = vunpack.c.h.b16 %v330
    %v378 = vunpack.c.l.b16 %v331
    %v379 = vunpack.c.h.b16 %v331
    %v380 = vunpack.c.l.b16 %v332
    %v381 = vunpack.c.h.b16 %v332
    %v382 = vunpack.c.l.b16 %v333
    %v383 = vunpack.c.h.b16 %v333
    %v384 = vunpack.c.l.b16 %v334
    %v385 = vunpack.c.h.b16 %v334
    %v386 = vunpack.c.l.b16 %v335
    %v387 = vunpack.c.h.b16 %v335
    %v388 = vunpack.c.l.b16 %v336
    %v389 = vunpack.c.h.b16 %v336
    %v390 = vunpack.c.l.b16 %v337
    %v391 = vunpack.c.h.b16 %v337
    %v392 = vunpack.c.l.b16 %v338
    %v393 = vunpack.c.h.b16 %v338
    %v394 = vunpack.c.l.b16 %v339
    %v395 = vunpack.c.h.b16 %v339
    %v396 = vunpack.c.l.b16 %v340
    %v397 = vunpack.c.h.b16 %v340
    %v398 = vunpack.c.l.b16 %v341
    %v399 = vunpack.c.h.b16 %v341
    %v400 = vunpack.c.l.b16 %v342
    %v401 = vunpack.c.h.b16 %v342
    %v402 = vunpack.c.l.b16 %v343
    %v403 = vunpack.c.h.b16 %v343
    %v404 = vpack.c.b16 %v374, %v372
    %v405 = vpack.c.b16 %v375, %v373
    %v406 = vpack.c.b16 %v378, %v376
    %v407 = vpack.c.b16 %v379, %v377
    %v408 = vpack.c.b16 %v382, %v380
    %v409 = vpack.c.b16 %v383, %v381
    %v410 = vpack.c.b16 %v386, %v384
    %v411 = vpack.c.b16 %v387, %v385
    %v412 = vpack.c.b16 %v390, %v388
    %v413 = vpack.c.b16 %v391, %v389
    %v414 = vpack.c.b16 %v394, %v392
    %v415 = vpack.c.b16 %v395, %v393
    %v416 = vpack.c.b16 %v398, %v396
    %v417 = vpack.c.b16 %v399, %v397
    %v418 = vpack.c.b16 %v402, %v400
    %v419 = vpack.c.b16 %v403, %v401
    %436 = vmatprep.subr.bf16.mxu0 %v405
    %437 = vmatpush1.bf16.msra.mxu0 %v404
    %438 = vmatprep.subr.bf16.mxu0 %v407
    %439 = vmatpush1.bf16.msra.mxu0 %v406
    %440 = vmatprep.subr.bf16.mxu0 %v409
    %441 = vmatpush1.bf16.msra.mxu0 %v408
    %442 = vmatprep.subr.bf16.mxu0 %v411
    %443 = vmatpush1.bf16.msra.mxu0 %v410
    %444 = vmatprep.subr.bf16.mxu0 %v413
    %445 = vmatpush1.bf16.msra.mxu0 %v412
    %446 = vmatprep.subr.bf16.mxu0 %v415
    %447 = vmatpush1.bf16.msra.mxu0 %v414
    %448 = vmatprep.subr.bf16.mxu0 %v417
    %449 = vmatpush1.bf16.msra.mxu0 %v416
    %450 = vmatprep.subr.bf16.mxu0 %v419
    %451 = vmatpush1.bf16.msra.mxu0 %v418
    %452 = vmatprep.subr.bf16.mxu0 0
    %453 = vmatpush1.bf16.msra.mxu0 0
    %454 = vmatprep.subr.bf16.mxu0 0
    %455 = vmatpush1.bf16.msra.mxu0 0
    %456 = vmatprep.subr.bf16.mxu0 0
    %457 = vmatpush1.bf16.msra.mxu0 0
    %458 = vmatprep.subr.bf16.mxu0 0
    %459 = vmatpush1.bf16.msra.mxu0 0
    %460 = vmatprep.subr.bf16.mxu0 0
    %461 = vmatpush1.bf16.msra.mxu0 0
    %462 = vmatprep.subr.bf16.mxu0 0
    %463 = vmatpush1.bf16.msra.mxu0 0
    %464 = vmatprep.subr.bf16.mxu0 0
    %465 = vmatpush1.bf16.msra.mxu0 0
    %466 = vmatprep.subr.bf16.mxu0 0
    %467 = vmatpush1.bf16.msra.mxu0 0
    %468 = vmatprep.mubr.bf16.mxu0 0
    %469 = vmatmul.mubr.bf16.gmra.mrb[0].mxu0 %v327
    %v470 = vpop.f32.mrb[0].mxu0
    %v471 = vadd.f32 %v349, %v470
    %v472 = vpop.f32.mrb[0].mxu0
    %v473 = vadd.f32 %v353, %v472
    %v474 = vpop.f32.mrb[0].mxu0
    %v475 = vpop.f32.mrb[0].mxu0
    %476 = vdwg.mxu0
    %v477 = vmul.f32 %v473, 0.5
    %v478 = vmul.f32 %v477, 1.442695
    %v479 = vpow.pop %v478
    %v480 = vmul.f32 %v116, %v479
    %v481 = vadd.f32 %v471, %v480
    %v482 = vpack.c.bf16 %v481, %v481
    %v483 = vld [vmem:[#allocation8] sm:$0xf]
    %v484 = vld [vmem:[#allocation8 + $0x4] sm:$0xf]
    %v485 = vld [vmem:[#allocation8 + $0x8] sm:$0xf]
    %v486 = vld [vmem:[#allocation8 + $0xc] sm:$0xf]
    %v487 = vld [vmem:[#allocation8 + $0x10] sm:$0xf]
    %v488 = vld [vmem:[#allocation8 + $0x14] sm:$0xf]
    %v489 = vld [vmem:[#allocation8 + $0x18] sm:$0xf]
    %v490 = vld [vmem:[#allocation8 + $0x1c] sm:$0xf]
    %v491 = vld [vmem:[#allocation8 + $0x20] sm:$0xf]
    %v492 = vld [vmem:[#allocation8 + $0x24] sm:$0xf]
    %v493 = vld [vmem:[#allocation8 + $0x28] sm:$0xf]
    %v494 = vld [vmem:[#allocation8 + $0x2c] sm:$0xf]
    %v495 = vld [vmem:[#allocation8 + $0x30] sm:$0xf]
    %v496 = vld [vmem:[#allocation8 + $0x34] sm:$0xf]
    %v497 = vld [vmem:[#allocation8 + $0x38] sm:$0xf]
    %v498 = vld [vmem:[#allocation8 + $0x3c] sm:$0xf]
    %v515 = vunpack.c.l.b16 %v483
    %v516 = vunpack.c.l.b16 %v484
    %v517 = vunpack.c.l.b16 %v485
    %v518 = vunpack.c.l.b16 %v486
    %v519 = vunpack.c.l.b16 %v487
    %v520 = vunpack.c.l.b16 %v488
    %v521 = vunpack.c.l.b16 %v489
    %v522 = vunpack.c.l.b16 %v490
    %v523 = vunpack.c.l.b16 %v491
    %v524 = vunpack.c.l.b16 %v492
    %v525 = vunpack.c.l.b16 %v493
    %v526 = vunpack.c.l.b16 %v494
    %v527 = vunpack.c.l.b16 %v495
    %v528 = vunpack.c.l.b16 %v496
    %v529 = vunpack.c.l.b16 %v497
    %v530 = vunpack.c.l.b16 %v498
    %v531 = vpack.c.b16 %v516, %v515
    %v532 = vpack.c.b16 %v518, %v517
    %v533 = vpack.c.b16 %v520, %v519
    %v534 = vpack.c.b16 %v522, %v521
    %v535 = vpack.c.b16 %v524, %v523
    %v536 = vpack.c.b16 %v526, %v525
    %v537 = vpack.c.b16 %v528, %v527
    %v538 = vpack.c.b16 %v530, %v529
    %547 = vmatprep.subr.bf16.mxu0 0
    %548 = vmatpush1.bf16.msra.mxu0 %v531
    %549 = vmatprep.subr.bf16.mxu0 0
    %550 = vmatpush1.bf16.msra.mxu0 %v532
    %551 = vmatprep.subr.bf16.mxu0 0
    %552 = vmatpush1.bf16.msra.mxu0 %v533
    %553 = vmatprep.subr.bf16.mxu0 0
    %554 = vmatpush1.bf16.msra.mxu0 %v534
    %555 = vmatprep.subr.bf16.mxu0 0
    %556 = vmatpush1.bf16.msra.mxu0 %v535
    %557 = vmatprep.subr.bf16.mxu0 0
    %558 = vmatpush1.bf16.msra.mxu0 %v536
    %559 = vmatprep.subr.bf16.mxu0 0
    %560 = vmatpush1.bf16.msra.mxu0 %v537
    %561 = vmatprep.subr.bf16.mxu0 0
    %562 = vmatpush1.bf16.msra.mxu0 %v538
    %563 = vmatprep.subr.bf16.mxu0 0
    %564 = vmatpush1.bf16.msra.mxu0 0
    %565 = vmatprep.subr.bf16.mxu0 0
    %566 = vmatpush1.bf16.msra.mxu0 0
    %567 = vmatprep.subr.bf16.mxu0 0
    %568 = vmatpush1.bf16.msra.mxu0 0
    %569 = vmatprep.subr.bf16.mxu0 0
    %570 = vmatpush1.bf16.msra.mxu0 0
    %571 = vmatprep.subr.bf16.mxu0 0
    %572 = vmatpush1.bf16.msra.mxu0 0
    %573 = vmatprep.subr.bf16.mxu0 0
    %574 = vmatpush1.bf16.msra.mxu0 0
    %575 = vmatprep.subr.bf16.mxu0 0
    %576 = vmatpush1.bf16.msra.mxu0 0
    %577 = vmatprep.subr.bf16.mxu0 0
    %578 = vmatpush1.bf16.msra.mxu0 0
    %579 = vmatprep.mubr.bf16.mxu0 0
    %580 = vmatmul.mubr.bf16.gmra.mrb[0].mxu0 %v482
    %v581 = vpop.f32.mrb[0].mxu0
    %v582 = vadd.f32 %v259, %v581
    %v583 = vpop.f32.mrb[0].mxu0
    %v584 = vpop.f32.mrb[0].mxu0
    %v585 = vpop.f32.mrb[0].mxu0
    %586 = vdwg.mxu0
    %v587 = vld [vmem:[%s9] sm:$0x1]
    %v589 = vlaneseq
    %v590 = vshrl.u32 %v589, 7
    %v591 = vsub.s32 0, %v590
    %v592 = vrot.slane %v587, %v591
    %v594 = vadd.f32 %v582, %v592
    %vm595 = vcmp.gt.f32.partialorder %v594, 0.0
    %v596 = vmul.f32 %v594, 0.01
    %v597 = vsel %vm595, %v594, %v596
    %v598 = vpack.c.bf16 %v597, %v597
    %v599 = vld [vmem:[#allocation10] sm:$0xf]
    %v600 = vld [vmem:[#allocation10 + $0x4] sm:$0xf]
    %v601 = vld [vmem:[#allocation10 + $0x8] sm:$0xf]
    %v602 = vld [vmem:[#allocation10 + $0xc] sm:$0xf]
    %v603 = vld [vmem:[#allocation10 + $0x10] sm:$0xf]
    %v604 = vld [vmem:[#allocation10 + $0x14] sm:$0xf]
    %v605 = vld [vmem:[#allocation10 + $0x18] sm:$0xf]
    %v606 = vld [vmem:[#allocation10 + $0x1c] sm:$0xf]
    %v607 = vld [vmem:[#allocation10 + $0x20] sm:$0xf]
    %v608 = vld [vmem:[#allocation10 + $0x24] sm:$0xf]
    %v609 = vld [vmem:[#allocation10 + $0x28] sm:$0xf]
    %v610 = vld [vmem:[#allocation10 + $0x2c] sm:$0xf]
    %v611 = vld [vmem:[#allocation10 + $0x30] sm:$0xf]
    %v612 = vld [vmem:[#allocation10 + $0x34] sm:$0xf]
    %v613 = vld [vmem:[#allocation10 + $0x38] sm:$0xf]
    %v614 = vld [vmem:[#allocation10 + $0x3c] sm:$0xf]
    %v615 = vld [vmem:[%s11] sm:$0x1]
    %v617 = vlaneseq
    %v618 = vshrl.u32 %v617, 7
    %v619 = vsub.s32 0, %v618
    %v620 = vrot.slane %v615, %v619
    %v638 = vunpack.c.l.b16 %v599
    %v639 = vunpack.c.l.b16 %v600
    %v640 = vunpack.c.l.b16 %v601
    %v641 = vunpack.c.l.b16 %v602
    %v642 = vunpack.c.l.b16 %v603
    %v643 = vunpack.c.l.b16 %v604
    %v644 = vunpack.c.l.b16 %v605
    %v645 = vunpack.c.l.b16 %v606
    %v646 = vunpack.c.l.b16 %v607
    %v647 = vunpack.c.l.b16 %v608
    %v648 = vunpack.c.l.b16 %v609
    %v649 = vunpack.c.l.b16 %v610
    %v650 = vunpack.c.l.b16 %v611
    %v651 = vunpack.c.l.b16 %v612
    %v652 = vunpack.c.l.b16 %v613
    %v653 = vunpack.c.l.b16 %v614
    %v654 = vpack.c.b16 %v639, %v638
    %v655 = vpack.c.b16 %v641, %v640
    %v656 = vpack.c.b16 %v643, %v642
    %v657 = vpack.c.b16 %v645, %v644
    %v658 = vpack.c.b16 %v647, %v646
    %v659 = vpack.c.b16 %v649, %v648
    %v660 = vpack.c.b16 %v651, %v650
    %v661 = vpack.c.b16 %v653, %v652
    %670 = vmatprep.subr.bf16.mxu0 0
    %671 = vmatpush1.bf16.msra.mxu0 %v654
    %672 = vmatprep.subr.bf16.mxu0 0
    %673 = vmatpush1.bf16.msra.mxu0 %v655
    %674 = vmatprep.subr.bf16.mxu0 0
    %675 = vmatpush1.bf16.msra.mxu0 %v656
    %676 = vmatprep.subr.bf16.mxu0 0
    %677 = vmatpush1.bf16.msra.mxu0 %v657
    %678 = vmatprep.subr.bf16.mxu0 0
    %679 = vmatpush1.bf16.msra.mxu0 %v658
    %680 = vmatprep.subr.bf16.mxu0 0
    %681 = vmatpush1.bf16.msra.mxu0 %v659
    %682 = vmatprep.subr.bf16.mxu0 0
    %683 = vmatpush1.bf16.msra.mxu0 %v660
    %684 = vmatprep.subr.bf16.mxu0 0
    %685 = vmatpush1.bf16.msra.mxu0 %v661
    %686 = vmatprep.subr.bf16.mxu0 0
    %687 = vmatpush1.bf16.msra.mxu0 0
    %688 = vmatprep.subr.bf16.mxu0 0
    %689 = vmatpush1.bf16.msra.mxu0 0
    %690 = vmatprep.subr.bf16.mxu0 0
    %691 = vmatpush1.bf16.msra.mxu0 0
    %692 = vmatprep.subr.bf16.mxu0 0
    %693 = vmatpush1.bf16.msra.mxu0 0
    %694 = vmatprep.subr.bf16.mxu0 0
    %695 = vmatpush1.bf16.msra.mxu0 0
    %696 = vmatprep.subr.bf16.mxu0 0
    %697 = vmatpush1.bf16.msra.mxu0 0
    %698 = vmatprep.subr.bf16.mxu0 0
    %699 = vmatpush1.bf16.msra.mxu0 0
    %700 = vmatprep.subr.bf16.mxu0 0
    %701 = vmatpush1.bf16.msra.mxu0 0
    %702 = vmatprep.mubr.bf16.mxu0 0
    %703 = vmatmul.mubr.bf16.gmra.mrb[0].mxu0 %v598
    %v704 = vpop.f32.mrb[0].mxu0
    %v705 = vadd.f32 %v620, %v704
    %v706 = vpop.f32.mrb[0].mxu0
    %v707 = vpop.f32.mrb[0].mxu0
    %v708 = vpop.f32.mrb[0].mxu0
    %709 = vdwg.mxu0
    %710 = vst [vmem:[#allocation11] sm:$0xff] %v471
    %711 = vst [vmem:[#allocation11 + $0x8] sm:$0xff] %v473
    %712 = vst [vmem:[#allocation11 + $0x10] sm:$0xff] %v481
    %v713 = vxor.u32 %v705, 2147483648
    %v714 = vmul.f32 %v713, 1.442695
    %v715 = vpow.pop %v714
    %v716 = vadd.f32 %v715, 1.0
    %v717 = vrcp.pop %v716
    %v718 = vmul.f32 1.0, %v717
    %719 = vst [vmem:[#allocation12] sm:$0xff] %v718
    // Predicated region
    $region70: #{tpu_custom_call.1} parent=1 // pred_check
      _
    $region71: #{tpu_custom_call.1} parent=1 // pred_check_branch
      %721 = sbr.rel (0) target = $region73
    $region72: #{tpu_custom_call.1} parent=1 // pred_region
      %s723 = ssub.s32 384, 384
      %724 = vsyncadd [#allocation4], %s723
      %s726 = sshll.u32 [#allocation11], 4
      %s727 = int_to_ptr.vmem [resolvable:$true] %s726
      %729 = dma.vmem_to_hbm [thread:$0]  %s727, 384, %s12, [#allocation4]
    $region73: #{tpu_custom_call.1} parent=1 // pred_fallthru
      _
    // Predicated region
    $region74: #{tpu_custom_call.1} parent=1 // pred_check
      _
    $region75: #{tpu_custom_call.1} parent=1 // pred_check_branch
      %731 = sbr.rel (0) target = $region77
    $region76: #{tpu_custom_call.1} parent=1 // pred_region
      %s733 = ssub.s32 128, 128
      %734 = vsyncadd [#allocation13], %s733
      %s736 = sshll.u32 [#allocation12], 4
      %s737 = int_to_ptr.vmem [resolvable:$true] %s736
      %739 = dma.vmem_to_hbm [thread:$0]  %s737, 128, %s13, [#allocation13]
    $region77: #{tpu_custom_call.1} parent=1 // pred_fallthru
      _
    // Predicated region
    $region78: #{tpu_custom_call.1} parent=1 // pred_check
      _
    $region79: #{tpu_custom_call.1} parent=1 // pred_check_branch
      %741 = sbr.rel (0) target = $region81
    $region80: #{tpu_custom_call.1} parent=1 // pred_region
      %742 = dma.done [#allocation4], 384
    $region81: #{tpu_custom_call.1} parent=1 // pred_fallthru
      _
    // Predicated region
    $region82: #{tpu_custom_call.1} parent=1 // pred_check
      _
    $region83: #{tpu_custom_call.1} parent=1 // pred_check_branch
      %744 = sbr.rel (0) target = $region85
    $region84: #{tpu_custom_call.1} parent=1 // pred_region
      %745 = dma.done [#allocation13], 128
    $region85: #{tpu_custom_call.1} parent=1 // pred_fallthru
      _
    %746 = vsyncpa [#allocation3], 1
    %747 = vsyncpa [#allocation6], 1
    %748 = vsyncpa [#allocation9], 1
    %749 = vsyncpa [#allocation4], 1
    %750 = vsyncpa [#allocation13], 1

</llo_original>
